<compile_context>
chip_gen: v5e
topology: v5e:2x2
jax: 0.10.0
libtpu: 0.0.40
codegen_flags: <defaults>
</compile_context>

<pallas_src>
import functools

import numpy as np
import jax
import jax.numpy as jnp
from jax.experimental import pallas as pl
from jax.experimental.pallas import tpu as pltpu


def _cdiv(a: int, b: int) -> int:
    return -(-a // b)


def _round_up(n: int, m: int) -> int:
    return _cdiv(n, m) * m


def _vmem_capacity_bytes() -> int:
    """Best-effort per-core VMEM capacity; conservative fallback (v7x = 64 MiB)."""
    try:
        info = pltpu.get_tpu_info()
        cap = getattr(info, "vmem_capacity_bytes", None)
        if cap:
            return int(cap)
    except Exception:
        pass
    return 64 << 20


def _pick_tile_b(B: int, C: int, M_pad: int, itemsize: int,
                 sublane: int, vmem_budget: int) -> int:
    """Largest batch tile such that double-buffered x/out tiles plus the
    (also double-buffered) selection matrix fit the VMEM budget.  Guarantees
    >=2 grid steps when B allows (v7x dual-TC) and balances the ragged tile."""
    sel_bytes = 2 * C * M_pad * itemsize            # Pallas double-buffers sel too
    tile = min(1024, _round_up(B, sublane))
    if B > sublane:                                  # allow >=2 "parallel" steps
        tile = min(tile, _round_up(_cdiv(B, 2), sublane))
    tile = max(sublane, _round_up(tile, sublane))
    while (tile > sublane
           and 2 * tile * (C + M_pad) * itemsize + sel_bytes > vmem_budget):
        tile = max(sublane, _round_up(tile // 2, sublane))
    # Balance tiles so an awkward B doesn't leave a nearly-empty last tile.
    num_tiles = _cdiv(B, tile)
    tile = _round_up(_cdiv(B, num_tiles), sublane)
    return max(sublane, min(tile, _round_up(B, sublane)))


def _masking_kernel(x_ref, sel_ref, o_ref, *, precision):
    # x_ref:   (TILE_B, C)       current batch tile (unpadded K)
    # sel_ref: (C,      M_pad)   loop-invariant one-hot selection matrix
    # o_ref:   (TILE_B, M_pad)   lane-dense output tile
    o_ref[...] = jnp.dot(
        x_ref[...], sel_ref[...],
        precision=precision,
        preferred_element_type=jnp.float32,
    ).astype(o_ref.dtype)


@functools.partial(jax.jit, static_argnames=("use_pallas",))
def _masking_impl(x: jax.Array, mask: jax.Array, use_pallas):
    B, C = x.shape
    M = mask.shape[0]

    # PyTorch-style negative indices.
    mask = mask.astype(jnp.int32)
    mask = jnp.where(mask < 0, mask + C, mask)

    itemsize = x.dtype.itemsize
    if use_pallas is None:
        # Auto-dispatch: for tiny problems kernel launch + grid overhead
        # dwarfs the gather; fall back to the XLA gather.
        use_pallas = (B >= 64) and (B * C * itemsize >= (1 << 21))
    if not use_pallas:
        return jnp.take(x, mask, axis=1)

    M_pad = _round_up(M, 128)
    sublane = max(8, 32 // itemsize)                # 8 f32, 16 bf16, 32 int8
    vmem_cap = _vmem_capacity_bytes()
    vmem_budget = min(vmem_cap * 3 // 4, 100 << 20)  # ~48 MiB v7x, ~96 MiB v5e/v6e
    TILE_B = _pick_tile_b(B, C, M_pad, itemsize, sublane, vmem_budget)
    grid = (_cdiv(B, TILE_B),)

    # Selection matrix built directly in (C, M_pad) layout; padded output
    # columns are tagged -1 and match no class index (all-zero columns).
    # TODO(synk): cache `sel` across calls when `mask` is fixed (module attr).
    mask_p = jnp.full((M_pad,), -1, jnp.int32).at[:M].set(mask)
    sel = (jax.lax.broadcasted_iota(jnp.int32, (C, M_pad), 0)
           == mask_p[None, :]).astype(x.dtype)

    # HIGHEST precision keeps the f32 one-hot matmul bit-exact vs a gather.
    precision = (jax.lax.Precision.HIGHEST
                 if x.dtype == jnp.float32 else jax.lax.Precision.DEFAULT)

    cost = pl.CostEstimate(
        flops=2 * B * C * M_pad,
        transcendentals=0,
        bytes_accessed=(B * C + C * M_pad + B * M_pad) * itemsize,
    )

    out_p = pl.pallas_call(
        functools.partial(_masking_kernel, precision=precision),
        out_shape=jax.ShapeDtypeStruct((B, M_pad), x.dtype),
        grid_spec=pl.GridSpec(
            grid=grid,
            in_specs=[
                # x unpadded: K extent equals the full array dim C (legal even
                # when C % 128 != 0); ragged last batch tile is masked.
                pl.BlockSpec((TILE_B, C), lambda i: (i, 0)),
                # Loop-invariant selection matrix (same block every step).
                pl.BlockSpec((C, M_pad), lambda i: (0, 0)),
            ],
            out_specs=pl.BlockSpec((TILE_B, M_pad), lambda i: (i, 0)),
        ),
        compiler_params=pltpu.CompilerParams(
            dimension_semantics=("parallel",),
            vmem_limit_bytes=int(vmem_budget),
        ),
        cost_estimate=cost,
    )(x, sel)

    # No row slice needed (output is already (B, ...)); only trim padded lanes.
    return out_p if M_pad == M else out_p[:, :M]


def imagenet_x_masking(x, mask, use_pallas=None):
    """Pallas equivalent of ImageNetXMaskingLayer.forward: x[:, mask].

    `mask` may be an int index vector (negative indices allowed) or a boolean
    class mask (hendrycks imagenet-r style).  `use_pallas=None` auto-dispatches
    tiny problems to the plain XLA gather.
    """
    m = np.asarray(mask)
    if m.dtype == np.bool_:
        m = np.nonzero(m)[0]
    return _masking_impl(x, jnp.asarray(m, dtype=jnp.int32), use_pallas)


if __name__ == "__main__":
    key = jax.random.PRNGKey(0)
    k_x, k_m = jax.random.split(key)

    # Small synthetic shapes consistent with the module: batch=4 logits over
    # 256 classes; mask selects 64 classes (ImageNet-R / -A style subset).
    B, C, M = 4, 256, 64
    x = jax.random.normal(k_x, (B, C), dtype=jnp.float32)
    mask = jax.random.permutation(k_m, jnp.arange(C, dtype=jnp.int32))[:M]

    ref = x[:, mask]

    # Force the Pallas path (auto-dispatch would route B=4 to jnp.take).
    out = jax.block_until_ready(imagenet_x_masking(x, mask, use_pallas=True))
    assert out.shape == (B, M)
    assert jnp.array_equal(out, ref), "Pallas kernel mismatch vs x[:, mask]"

    # Auto-dispatch path (tiny problem -> XLA gather).
    out_auto = jax.block_until_ready(imagenet_x_masking(x, mask))
    assert jnp.array_equal(out_auto, ref)

    # Boolean-mask variant, as used by the original ImageNet-R eval code.
    bool_mask = np.zeros((C,), dtype=bool)
    bool_mask[np.asarray(mask)] = True
    out_bool = jax.block_until_ready(
        imagenet_x_masking(x, bool_mask, use_pallas=True))
    sorted_idx = np.nonzero(bool_mask)[0]
    assert jnp.array_equal(out_bool, x[:, sorted_idx])

    print("KERNEL_OK")
</pallas_src>

<mosaic_0001>
module attributes {stable_mosaic.version = 11 : i64} {
  func.func @_masking_kernel(%arg0: i32, %arg1: memref<8x256xf32, #tpu.memory_space<vmem>>, %arg2: memref<256x128xf32, #tpu.memory_space<vmem>>, %arg3: memref<8x128xf32, #tpu.memory_space<vmem>>) attributes {dimension_semantics = [#tpu.dimension_semantics<parallel>], iteration_bounds = array<i64: 1>, scalar_prefetch = 0 : i64, scratch_operands = 0 : i64, tpu.core_type = #tpu.core_type<tc>, window_params = [{transform_indices = @transform_0, window_bounds = array<i64: 8, 256>}, {pipeline_mode = #tpu.pipeline_mode<synchronous>, transform_indices = @transform_1, window_bounds = array<i64: 256, 128>}, {transform_indices = @transform_2, window_bounds = array<i64: 8, 128>}]} {
    %c0 = arith.constant 0 : index
    %c0_0 = arith.constant 0 : index
    %0 = vector.load %arg1[%c0, %c0_0] : memref<8x256xf32, #tpu.memory_space<vmem>>, vector<8x256xf32>
    %c0_1 = arith.constant 0 : index
    %c0_2 = arith.constant 0 : index
    %1 = vector.load %arg2[%c0_1, %c0_2] : memref<256x128xf32, #tpu.memory_space<vmem>>, vector<256x128xf32>
    %cst = arith.constant dense<0.000000e+00> : vector<8x128xf32>
    %2 = tpu.matmul %0, %1, %cst {dimension_numbers = #tpu.dot_dimension_numbers<[1], [0], [0], [1], [0, 0, 1, 1], [], []>, precision = #tpu.contract_precision<fp32>} : vector<8x256xf32>, vector<256x128xf32>, vector<8x128xf32> -> vector<8x128xf32>
    %c0_3 = arith.constant 0 : index
    %c0_4 = arith.constant 0 : index
    %3 = vector.load %arg3[%c0_3, %c0_4] : memref<8x128xf32, #tpu.memory_space<vmem>>, vector<8x128xf32>
    tpu.vector_store %arg3[%c0_3, %c0_4], %2 {strides = array<i32>} : memref<8x128xf32, #tpu.memory_space<vmem>>, vector<8x128xf32>,
    return
  }
  func.func @transform_0(%arg0: i32) -> (i32, i32) {
    %c0_i32 = arith.constant 0 : i32
    %c0_i32_0 = arith.constant 0 : i32
    return %arg0, %c0_i32 : i32, i32
  }
  func.func @transform_1(%arg0: i32) -> (i32, i32) {
    %c0_i32 = arith.constant 0 : i32
    %c0_i32_0 = arith.constant 0 : i32
    %c0_i32_1 = arith.constant 0 : i32
    return %c0_i32, %c0_i32_0 : i32, i32
  }
  func.func @transform_2(%arg0: i32) -> (i32, i32) {
    %c0_i32 = arith.constant 0 : i32
    %c0_i32_0 = arith.constant 0 : i32
    return %arg0, %c0_i32 : i32, i32
  }
}

</mosaic_0001>

<llo_original>
// kernel: _masking_impl.1
$region0: #{_masking_impl.1}
  #allocation0 [shape = 'u32[]', space=smem, size = 0x4, offset = 0x4, fixed_abs, tag = 'smem constant byte address 0x4 - core index']
  #allocation1 [shape = 'u32[72,128]{1,0:T(1,128)}', space=vmem, size = 0x9000, scoped, tag = 'internal scratch']
  %s0 = inlined_call_operand.vmem [shape: f32[4,256], index: 0, kind: input, shape index: {}]
  %s1 = inlined_call_operand.vmem [shape: f32[256,128], index: 1, kind: input, shape index: {}]
  %s2 = inlined_call_operand.hbm [shape: f32[4,128], index: 2, kind: output, shape index: {}]
  %s3 = sld [smem:[#allocation0]]
  $region18: #{_masking_impl.1} parent=0
    _
  %s5 = ssub.s32 1, %s3
  %s6 = scalar_select 0, %s5, %s3
  $region1: #{_masking_impl.1} parent=0
    #allocation2 [shape = 'u8[4096]{0}', space=vmem, size = 0x1000, scoped, tag = 'output window, operand 0, single buffered']
    #allocation3 [shape = 's32[1]{0}', space=sflag, size = 0x4, scoped, tag = 'scoped memory for _masking_impl.1']
    %7 = vsyncpa [#allocation3], 0
    // Predicated region
    $region2: #{_masking_impl.1} parent=1 // pred_check
      _
    $region3: #{_masking_impl.1} parent=1 // pred_check_branch
      %9 = sbr.rel (0) target = $region5
    $region4: #{_masking_impl.1} parent=1 // pred_region
      _
    $region5: #{_masking_impl.1} parent=1 // pred_fallthru
      _
    // Predicated region
    $region6: #{_masking_impl.1} parent=1 // pred_check
      _
    $region7: #{_masking_impl.1} parent=1 // pred_check_branch
      %11 = sbr.rel (0) target = $region9
    $region8: #{_masking_impl.1} parent=1 // pred_region
      _
    $region9: #{_masking_impl.1} parent=1 // pred_fallthru
      _
    %v12 = vld [vmem:[%s0] sm:$0xff]
    %v13 = vld [vmem:[%s0 + $0x8] sm:$0xff]
    %v14 = vld [vmem:[%s1] sm:$0xff]
    %v15 = vld [vmem:[%s1 + $0x8] sm:$0xff]
    %v16 = vld [vmem:[%s1 + $0x10] sm:$0xff]
    %v17 = vld [vmem:[%s1 + $0x18] sm:$0xff]
    %v18 = vld [vmem:[%s1 + $0x20] sm:$0xff]
    %v19 = vld [vmem:[%s1 + $0x28] sm:$0xff]
    %v20 = vld [vmem:[%s1 + $0x30] sm:$0xff]
    %v21 = vld [vmem:[%s1 + $0x38] sm:$0xff]
    %v22 = vld [vmem:[%s1 + $0x40] sm:$0xff]
    %v23 = vld [vmem:[%s1 + $0x48] sm:$0xff]
    %v24 = vld [vmem:[%s1 + $0x50] sm:$0xff]
    %v25 = vld [vmem:[%s1 + $0x58] sm:$0xff]
    %v26 = vld [vmem:[%s1 + $0x60] sm:$0xff]
    %v27 = vld [vmem:[%s1 + $0x68] sm:$0xff]
    %v28 = vld [vmem:[%s1 + $0x70] sm:$0xff]
    %v29 = vld [vmem:[%s1 + $0x78] sm:$0xff]
    %v30 = vld [vmem:[%s1 + $0x80] sm:$0xff]
    %v31 = vld [vmem:[%s1 + $0x88] sm:$0xff]
    %v32 = vld [vmem:[%s1 + $0x90] sm:$0xff]
    %v33 = vld [vmem:[%s1 + $0x98] sm:$0xff]
    %v34 = vld [vmem:[%s1 + $0xa0] sm:$0xff]
    %v35 = vld [vmem:[%s1 + $0xa8] sm:$0xff]
    %v36 = vld [vmem:[%s1 + $0xb0] sm:$0xff]
    %v37 = vld [vmem:[%s1 + $0xb8] sm:$0xff]
    %v38 = vld [vmem:[%s1 + $0xc0] sm:$0xff]
    %v39 = vld [vmem:[%s1 + $0xc8] sm:$0xff]
    %v40 = vld [vmem:[%s1 + $0xd0] sm:$0xff]
    %v41 = vld [vmem:[%s1 + $0xd8] sm:$0xff]
    %v42 = vld [vmem:[%s1 + $0xe0] sm:$0xff]
    %v43 = vld [vmem:[%s1 + $0xe8] sm:$0xff]
    %v44 = vld [vmem:[%s1 + $0xf0] sm:$0xff]
    %v45 = vld [vmem:[%s1 + $0xf8] sm:$0xff]
    %48 = vst [vmem:[#allocation1] ss:$2 sm:$0xff] %v12
    %s49 = scalar_lea.vmem [#allocation1], 1
    %50 = vst [vmem:[%s49] ss:$2 sm:$0xff] %v13
    %v51 = vld.sshfl [vmem:[#allocation1] sm:$0xff pattern:$0x75316420]
    %v52 = vld.sshfl [vmem:[#allocation1 + $0x8] sm:$0xff pattern:$0x75316420]
    %v55 = vand.u32 %v29, 4294901760
    %56 = vmatpush.msra.mxu0 %v55
    %v57 = vand.u32 %v28, 4294901760
    %58 = vmatpush.msra.mxu0 %v57
    %v59 = vand.u32 %v27, 4294901760
    %60 = vmatpush.msra.mxu0 %v59
    %v61 = vand.u32 %v26, 4294901760
    %62 = vmatpush.msra.mxu0 %v61
    %v63 = vand.u32 %v25, 4294901760
    %64 = vmatpush.msra.mxu0 %v63
    %v65 = vand.u32 %v24, 4294901760
    %66 = vmatpush.msra.mxu0 %v65
    %v67 = vand.u32 %v23, 4294901760
    %68 = vmatpush.msra.mxu0 %v67
    %v69 = vand.u32 %v22, 4294901760
    %70 = vmatpush.msra.mxu0 %v69
    %v71 = vand.u32 %v21, 4294901760
    %72 = vmatpush.msra.mxu0 %v71
    %v73 = vand.u32 %v20, 4294901760
    %74 = vmatpush.msra.mxu0 %v73
    %v75 = vand.u32 %v19, 4294901760
    %76 = vmatpush.msra.mxu0 %v75
    %v77 = vand.u32 %v18, 4294901760
    %78 = vmatpush.msra.mxu0 %v77
    %v79 = vand.u32 %v17, 4294901760
    %80 = vmatpush.msra.mxu0 %v79
    %v81 = vand.u32 %v16, 4294901760
    %82 = vmatpush.msra.mxu0 %v81
    %v83 = vand.u32 %v15, 4294901760
    %84 = vmatpush.msra.mxu0 %v83
    %v85 = vand.u32 %v14, 4294901760
    %86 = vmatpush.msra.mxu0 %v85
    %v87 = vand.u32 %v51, 4294901760
    %v88 = vsub.f32 %v51, %v87
    %v89 = vand.u32 %v88, 4294901760
    %v90 = vsub.f32 %v88, %v89
    %v91 = vand.u32 %v90, 4294901760
    %92 = vmatmul.f32.gmra.mxu0 %v91
    %v93 = vpop.f32.mrf.mxu0
    %v94 = vadd.f32 0.0, %v93
    %95 = vdwg.mxu0
    %v96 = vand.u32 %v29, 4294901760
    %v97 = vsub.f32 %v29, %v96
    %v98 = vand.u32 %v97, 4294901760
    %v99 = vsub.f32 %v97, %v98
    %v100 = vand.u32 %v99, 4294901760
    %101 = vmatpush.msra.mxu0 %v100
    %v102 = vand.u32 %v28, 4294901760
    %v103 = vsub.f32 %v28, %v102
    %v104 = vand.u32 %v103, 4294901760
    %v105 = vsub.f32 %v103, %v104
    %v106 = vand.u32 %v105, 4294901760
    %107 = vmatpush.msra.mxu0 %v106
    %v108 = vand.u32 %v27, 4294901760
    %v109 = vsub.f32 %v27, %v108
    %v110 = vand.u32 %v109, 4294901760
    %v111 = vsub.f32 %v109, %v110
    %v112 = vand.u32 %v111, 4294901760
    %113 = vmatpush.msra.mxu0 %v112
    %v114 = vand.u32 %v26, 4294901760
    %v115 = vsub.f32 %v26, %v114
    %v116 = vand.u32 %v115, 4294901760
    %v117 = vsub.f32 %v115, %v116
    %v118 = vand.u32 %v117, 4294901760
    %119 = vmatpush.msra.mxu0 %v118
    %v120 = vand.u32 %v25, 4294901760
    %v121 = vsub.f32 %v25, %v120
    %v122 = vand.u32 %v121, 4294901760
    %v123 = vsub.f32 %v121, %v122
    %v124 = vand.u32 %v123, 4294901760
    %125 = vmatpush.msra.mxu0 %v124
    %v126 = vand.u32 %v24, 4294901760
    %v127 = vsub.f32 %v24, %v126
    %v128 = vand.u32 %v127, 4294901760
    %v129 = vsub.f32 %v127, %v128
    %v130 = vand.u32 %v129, 4294901760
    %131 = vmatpush.msra.mxu0 %v130
    %v132 = vand.u32 %v23, 4294901760
    %v133 = vsub.f32 %v23, %v132
    %v134 = vand.u32 %v133, 4294901760
    %v135 = vsub.f32 %v133, %v134
    %v136 = vand.u32 %v135, 4294901760
    %137 = vmatpush.msra.mxu0 %v136
    %v138 = vand.u32 %v22, 4294901760
    %v139 = vsub.f32 %v22, %v138
    %v140 = vand.u32 %v139, 4294901760
    %v141 = vsub.f32 %v139, %v140
    %v142 = vand.u32 %v141, 4294901760
    %143 = vmatpush.msra.mxu0 %v142
    %v144 = vand.u32 %v21, 4294901760
    %v145 = vsub.f32 %v21, %v144
    %v146 = vand.u32 %v145, 4294901760
    %v147 = vsub.f32 %v145, %v146
    %v148 = vand.u32 %v147, 4294901760
    %149 = vmatpush.msra.mxu0 %v148
    %v150 = vand.u32 %v20, 4294901760
    %v151 = vsub.f32 %v20, %v150
    %v152 = vand.u32 %v151, 4294901760
    %v153 = vsub.f32 %v151, %v152
    %v154 = vand.u32 %v153, 4294901760
    %155 = vmatpush.msra.mxu0 %v154
    %v156 = vand.u32 %v19, 4294901760
    %v157 = vsub.f32 %v19, %v156
    %v158 = vand.u32 %v157, 4294901760
    %v159 = vsub.f32 %v157, %v158
    %v160 = vand.u32 %v159, 4294901760
    %161 = vmatpush.msra.mxu0 %v160
    %v162 = vand.u32 %v18, 4294901760
    %v163 = vsub.f32 %v18, %v162
    %v164 = vand.u32 %v163, 4294901760
    %v165 = vsub.f32 %v163, %v164
    %v166 = vand.u32 %v165, 4294901760
    %167 = vmatpush.msra.mxu0 %v166
    %v168 = vand.u32 %v17, 4294901760
    %v169 = vsub.f32 %v17, %v168
    %v170 = vand.u32 %v169, 4294901760
    %v171 = vsub.f32 %v169, %v170
    %v172 = vand.u32 %v171, 4294901760
    %173 = vmatpush.msra.mxu0 %v172
    %v174 = vand.u32 %v16, 4294901760
    %v175 = vsub.f32 %v16, %v174
    %v176 = vand.u32 %v175, 4294901760
    %v177 = vsub.f32 %v175, %v176
    %v178 = vand.u32 %v177, 4294901760
    %179 = vmatpush.msra.mxu0 %v178
    %v180 = vand.u32 %v15, 4294901760
    %v181 = vsub.f32 %v15, %v180
    %v182 = vand.u32 %v181, 4294901760
    %v183 = vsub.f32 %v181, %v182
    %v184 = vand.u32 %v183, 4294901760
    %185 = vmatpush.msra.mxu0 %v184
    %v186 = vand.u32 %v14, 4294901760
    %v187 = vsub.f32 %v14, %v186
    %v188 = vand.u32 %v187, 4294901760
    %v189 = vsub.f32 %v187, %v188
    %v190 = vand.u32 %v189, 4294901760
    %191 = vmatpush.msra.mxu0 %v190
    %v192 = vand.u32 %v51, 4294901760
    %193 = vmatmul.f32.gmra.mxu0 %v192
    %v194 = vpop.f32.mrf.mxu0
    %v195 = vadd.f32 %v94, %v194
    %196 = vdwg.mxu0
    %v197 = vand.u32 %v29, 4294901760
    %v198 = vsub.f32 %v29, %v197
    %199 = vmatpush.msra.mxu0 %v198
    %v200 = vand.u32 %v28, 4294901760
    %v201 = vsub.f32 %v28, %v200
    %202 = vmatpush.msra.mxu0 %v201
    %v203 = vand.u32 %v27, 4294901760
    %v204 = vsub.f32 %v27, %v203
    %205 = vmatpush.msra.mxu0 %v204
    %v206 = vand.u32 %v26, 4294901760
    %v207 = vsub.f32 %v26, %v206
    %208 = vmatpush.msra.mxu0 %v207
    %v209 = vand.u32 %v25, 4294901760
    %v210 = vsub.f32 %v25, %v209
    %211 = vmatpush.msra.mxu0 %v210
    %v212 = vand.u32 %v24, 4294901760
    %v213 = vsub.f32 %v24, %v212
    %214 = vmatpush.msra.mxu0 %v213
    %v215 = vand.u32 %v23, 4294901760
    %v216 = vsub.f32 %v23, %v215
    %217 = vmatpush.msra.mxu0 %v216
    %v218 = vand.u32 %v22, 4294901760
    %v219 = vsub.f32 %v22, %v218
    %220 = vmatpush.msra.mxu0 %v219
    %v221 = vand.u32 %v21, 4294901760
    %v222 = vsub.f32 %v21, %v221
    %223 = vmatpush.msra.mxu0 %v222
    %v224 = vand.u32 %v20, 4294901760
    %v225 = vsub.f32 %v20, %v224
    %226 = vmatpush.msra.mxu0 %v225
    %v227 = vand.u32 %v19, 4294901760
    %v228 = vsub.f32 %v19, %v227
    %229 = vmatpush.msra.mxu0 %v228
    %v230 = vand.u32 %v18, 4294901760
    %v231 = vsub.f32 %v18, %v230
    %232 = vmatpush.msra.mxu0 %v231
    %v233 = vand.u32 %v17, 4294901760
    %v234 = vsub.f32 %v17, %v233
    %235 = vmatpush.msra.mxu0 %v234
    %v236 = vand.u32 %v16, 4294901760
    %v237 = vsub.f32 %v16, %v236
    %238 = vmatpush.msra.mxu0 %v237
    %v239 = vand.u32 %v15, 4294901760
    %v240 = vsub.f32 %v15, %v239
    %241 = vmatpush.msra.mxu0 %v240
    %v242 = vand.u32 %v14, 4294901760
    %v243 = vsub.f32 %v14, %v242
    %244 = vmatpush.msra.mxu0 %v243
    %v245 = vand.u32 %v51, 4294901760
    %v246 = vsub.f32 %v51, %v245
    %247 = vmatmul.f32.gmra.mxu0 %v246
    %v248 = vpop.f32.mrf.mxu0
    %v249 = vadd.f32 %v195, %v248
    %250 = vdwg.mxu0
    %v251 = vand.u32 %v29, 4294901760
    %252 = vmatpush.msra.mxu0 %v251
    %v253 = vand.u32 %v28, 4294901760
    %254 = vmatpush.msra.mxu0 %v253
    %v255 = vand.u32 %v27, 4294901760
    %256 = vmatpush.msra.mxu0 %v255
    %v257 = vand.u32 %v26, 4294901760
    %258 = vmatpush.msra.mxu0 %v257
    %v259 = vand.u32 %v25, 4294901760
    %260 = vmatpush.msra.mxu0 %v259
    %v261 = vand.u32 %v24, 4294901760
    %262 = vmatpush.msra.mxu0 %v261
    %v263 = vand.u32 %v23, 4294901760
    %264 = vmatpush.msra.mxu0 %v263
    %v265 = vand.u32 %v22, 4294901760
    %266 = vmatpush.msra.mxu0 %v265
    %v267 = vand.u32 %v21, 4294901760
    %268 = vmatpush.msra.mxu0 %v267
    %v269 = vand.u32 %v20, 4294901760
    %270 = vmatpush.msra.mxu0 %v269
    %v271 = vand.u32 %v19, 4294901760
    %272 = vmatpush.msra.mxu0 %v271
    %v273 = vand.u32 %v18, 4294901760
    %274 = vmatpush.msra.mxu0 %v273
    %v275 = vand.u32 %v17, 4294901760
    %276 = vmatpush.msra.mxu0 %v275
    %v277 = vand.u32 %v16, 4294901760
    %278 = vmatpush.msra.mxu0 %v277
    %v279 = vand.u32 %v15, 4294901760
    %280 = vmatpush.msra.mxu0 %v279
    %v281 = vand.u32 %v14, 4294901760
    %282 = vmatpush.msra.mxu0 %v281
    %v283 = vand.u32 %v51, 4294901760
    %v284 = vsub.f32 %v51, %v283
    %v285 = vand.u32 %v284, 4294901760
    %286 = vmatmul.f32.gmra.mxu0 %v285
    %v287 = vpop.f32.mrf.mxu0
    %v288 = vadd.f32 %v249, %v287
    %289 = vdwg.mxu0
    %v290 = vand.u32 %v29, 4294901760
    %v291 = vsub.f32 %v29, %v290
    %v292 = vand.u32 %v291, 4294901760
    %293 = vmatpush.msra.mxu0 %v292
    %v294 = vand.u32 %v28, 4294901760
    %v295 = vsub.f32 %v28, %v294
    %v296 = vand.u32 %v295, 4294901760
    %297 = vmatpush.msra.mxu0 %v296
    %v298 = vand.u32 %v27, 4294901760
    %v299 = vsub.f32 %v27, %v298
    %v300 = vand.u32 %v299, 4294901760
    %301 = vmatpush.msra.mxu0 %v300
    %v302 = vand.u32 %v26, 4294901760
    %v303 = vsub.f32 %v26, %v302
    %v304 = vand.u32 %v303, 4294901760
    %305 = vmatpush.msra.mxu0 %v304
    %v306 = vand.u32 %v25, 4294901760
    %v307 = vsub.f32 %v25, %v306
    %v308 = vand.u32 %v307, 4294901760
    %309 = vmatpush.msra.mxu0 %v308
    %v310 = vand.u32 %v24, 4294901760
    %v311 = vsub.f32 %v24, %v310
    %v312 = vand.u32 %v311, 4294901760
    %313 = vmatpush.msra.mxu0 %v312
    %v314 = vand.u32 %v23, 4294901760
    %v315 = vsub.f32 %v23, %v314
    %v316 = vand.u32 %v315, 4294901760
    %317 = vmatpush.msra.mxu0 %v316
    %v318 = vand.u32 %v22, 4294901760
    %v319 = vsub.f32 %v22, %v318
    %v320 = vand.u32 %v319, 4294901760
    %321 = vmatpush.msra.mxu0 %v320
    %v322 = vand.u32 %v21, 4294901760
    %v323 = vsub.f32 %v21, %v322
    %v324 = vand.u32 %v323, 4294901760
    %325 = vmatpush.msra.mxu0 %v324
    %v326 = vand.u32 %v20, 4294901760
    %v327 = vsub.f32 %v20, %v326
    %v328 = vand.u32 %v327, 4294901760
    %329 = vmatpush.msra.mxu0 %v328
    %v330 = vand.u32 %v19, 4294901760
    %v331 = vsub.f32 %v19, %v330
    %v332 = vand.u32 %v331, 4294901760
    %333 = vmatpush.msra.mxu0 %v332
    %v334 = vand.u32 %v18, 4294901760
    %v335 = vsub.f32 %v18, %v334
    %v336 = vand.u32 %v335, 4294901760
    %337 = vmatpush.msra.mxu0 %v336
    %v338 = vand.u32 %v17, 4294901760
    %v339 = vsub.f32 %v17, %v338
    %v340 = vand.u32 %v339, 4294901760
    %341 = vmatpush.msra.mxu0 %v340
    %v342 = vand.u32 %v16, 4294901760
    %v343 = vsub.f32 %v16, %v342
    %v344 = vand.u32 %v343, 4294901760
    %345 = vmatpush.msra.mxu0 %v344
    %v346 = vand.u32 %v15, 4294901760
    %v347 = vsub.f32 %v15, %v346
    %v348 = vand.u32 %v347, 4294901760
    %349 = vmatpush.msra.mxu0 %v348
    %v350 = vand.u32 %v14, 4294901760
    %v351 = vsub.f32 %v14, %v350
    %v352 = vand.u32 %v351, 4294901760
    %353 = vmatpush.msra.mxu0 %v352
    %v354 = vand.u32 %v51, 4294901760
    %355 = vmatmul.f32.gmra.mxu0 %v354
    %v356 = vpop.f32.mrf.mxu0
    %v357 = vadd.f32 %v288, %v356
    %358 = vdwg.mxu0
    %v359 = vand.u32 %v29, 4294901760
    %360 = vmatpush.msra.mxu0 %v359
    %v361 = vand.u32 %v28, 4294901760
    %362 = vmatpush.msra.mxu0 %v361
    %v363 = vand.u32 %v27, 4294901760
    %364 = vmatpush.msra.mxu0 %v363
    %v365 = vand.u32 %v26, 4294901760
    %366 = vmatpush.msra.mxu0 %v365
    %v367 = vand.u32 %v25, 4294901760
    %368 = vmatpush.msra.mxu0 %v367
    %v369 = vand.u32 %v24, 4294901760
    %370 = vmatpush.msra.mxu0 %v369
    %v371 = vand.u32 %v23, 4294901760
    %372 = vmatpush.msra.mxu0 %v371
    %v373 = vand.u32 %v22, 4294901760
    %374 = vmatpush.msra.mxu0 %v373
    %v375 = vand.u32 %v21, 4294901760
    %376 = vmatpush.msra.mxu0 %v375
    %v377 = vand.u32 %v20, 4294901760
    %378 = vmatpush.msra.mxu0 %v377
    %v379 = vand.u32 %v19, 4294901760
    %380 = vmatpush.msra.mxu0 %v379
    %v381 = vand.u32 %v18, 4294901760
    %382 = vmatpush.msra.mxu0 %v381
    %v383 = vand.u32 %v17, 4294901760
    %384 = vmatpush.msra.mxu0 %v383
    %v385 = vand.u32 %v16, 4294901760
    %386 = vmatpush.msra.mxu0 %v385
    %v387 = vand.u32 %v15, 4294901760
    %388 = vmatpush.msra.mxu0 %v387
    %v389 = vand.u32 %v14, 4294901760
    %390 = vmatpush.msra.mxu0 %v389
    %v391 = vand.u32 %v51, 4294901760
    %392 = vmatmul.f32.gmra.mxu0 %v391
    %v393 = vpop.f32.mrf.mxu0
    %v394 = vadd.f32 %v357, %v393
    %395 = vdwg.mxu0
    %v396 = vand.u32 %v45, 4294901760
    %397 = vmatpush.msra.mxu0 %v396
    %v398 = vand.u32 %v44, 4294901760
    %399 = vmatpush.msra.mxu0 %v398
    %v400 = vand.u32 %v43, 4294901760
    %401 = vmatpush.msra.mxu0 %v400
    %v402 = vand.u32 %v42, 4294901760
    %403 = vmatpush.msra.mxu0 %v402
    %v404 = vand.u32 %v41, 4294901760
    %405 = vmatpush.msra.mxu0 %v404
    %v406 = vand.u32 %v40, 4294901760
    %407 = vmatpush.msra.mxu0 %v406
    %v408 = vand.u32 %v39, 4294901760
    %409 = vmatpush.msra.mxu0 %v408
    %v410 = vand.u32 %v38, 4294901760
    %411 = vmatpush.msra.mxu0 %v410
    %v412 = vand.u32 %v37, 4294901760
    %413 = vmatpush.msra.mxu0 %v412
    %v414 = vand.u32 %v36, 4294901760
    %415 = vmatpush.msra.mxu0 %v414
    %v416 = vand.u32 %v35, 4294901760
    %417 = vmatpush.msra.mxu0 %v416
    %v418 = vand.u32 %v34, 4294901760
    %419 = vmatpush.msra.mxu0 %v418
    %v420 = vand.u32 %v33, 4294901760
    %421 = vmatpush.msra.mxu0 %v420
    %v422 = vand.u32 %v32, 4294901760
    %423 = vmatpush.msra.mxu0 %v422
    %v424 = vand.u32 %v31, 4294901760
    %425 = vmatpush.msra.mxu0 %v424
    %v426 = vand.u32 %v30, 4294901760
    %427 = vmatpush.msra.mxu0 %v426
    %v428 = vand.u32 %v52, 4294901760
    %v429 = vsub.f32 %v52, %v428
    %v430 = vand.u32 %v429, 4294901760
    %v431 = vsub.f32 %v429, %v430
    %v432 = vand.u32 %v431, 4294901760
    %433 = vmatmul.f32.gmra.mxu0 %v432
    %v434 = vpop.f32.mrf.mxu0
    %v435 = vadd.f32 %v394, %v434
    %436 = vdwg.mxu0
    %v437 = vand.u32 %v45, 4294901760
    %v438 = vsub.f32 %v45, %v437
    %v439 = vand.u32 %v438, 4294901760
    %v440 = vsub.f32 %v438, %v439
    %v441 = vand.u32 %v440, 4294901760
    %442 = vmatpush.msra.mxu0 %v441
    %v443 = vand.u32 %v44, 4294901760
    %v444 = vsub.f32 %v44, %v443
    %v445 = vand.u32 %v444, 4294901760
    %v446 = vsub.f32 %v444, %v445
    %v447 = vand.u32 %v446, 4294901760
    %448 = vmatpush.msra.mxu0 %v447
    %v449 = vand.u32 %v43, 4294901760
    %v450 = vsub.f32 %v43, %v449
    %v451 = vand.u32 %v450, 4294901760
    %v452 = vsub.f32 %v450, %v451
    %v453 = vand.u32 %v452, 4294901760
    %454 = vmatpush.msra.mxu0 %v453
    %v455 = vand.u32 %v42, 4294901760
    %v456 = vsub.f32 %v42, %v455
    %v457 = vand.u32 %v456, 4294901760
    %v458 = vsub.f32 %v456, %v457
    %v459 = vand.u32 %v458, 4294901760
    %460 = vmatpush.msra.mxu0 %v459
    %v461 = vand.u32 %v41, 4294901760
    %v462 = vsub.f32 %v41, %v461
    %v463 = vand.u32 %v462, 4294901760
    %v464 = vsub.f32 %v462, %v463
    %v465 = vand.u32 %v464, 4294901760
    %466 = vmatpush.msra.mxu0 %v465
    %v467 = vand.u32 %v40, 4294901760
    %v468 = vsub.f32 %v40, %v467
    %v469 = vand.u32 %v468, 4294901760
    %v470 = vsub.f32 %v468, %v469
    %v471 = vand.u32 %v470, 4294901760
    %472 = vmatpush.msra.mxu0 %v471
    %v473 = vand.u32 %v39, 4294901760
    %v474 = vsub.f32 %v39, %v473
    %v475 = vand.u32 %v474, 4294901760
    %v476 = vsub.f32 %v474, %v475
    %v477 = vand.u32 %v476, 4294901760
    %478 = vmatpush.msra.mxu0 %v477
    %v479 = vand.u32 %v38, 4294901760
    %v480 = vsub.f32 %v38, %v479
    %v481 = vand.u32 %v480, 4294901760
    %v482 = vsub.f32 %v480, %v481
    %v483 = vand.u32 %v482, 4294901760
    %484 = vmatpush.msra.mxu0 %v483
    %v485 = vand.u32 %v37, 4294901760
    %v486 = vsub.f32 %v37, %v485
    %v487 = vand.u32 %v486, 4294901760
    %v488 = vsub.f32 %v486, %v487
    %v489 = vand.u32 %v488, 4294901760
    %490 = vmatpush.msra.mxu0 %v489
    %v491 = vand.u32 %v36, 4294901760
    %v492 = vsub.f32 %v36, %v491
    %v493 = vand.u32 %v492, 4294901760
    %v494 = vsub.f32 %v492, %v493
    %v495 = vand.u32 %v494, 4294901760
    %496 = vmatpush.msra.mxu0 %v495
    %v497 = vand.u32 %v35, 4294901760
    %v498 = vsub.f32 %v35, %v497
    %v499 = vand.u32 %v498, 4294901760
    %v500 = vsub.f32 %v498, %v499
    %v501 = vand.u32 %v500, 4294901760
    %502 = vmatpush.msra.mxu0 %v501
    %v503 = vand.u32 %v34, 4294901760
    %v504 = vsub.f32 %v34, %v503
    %v505 = vand.u32 %v504, 4294901760
    %v506 = vsub.f32 %v504, %v505
    %v507 = vand.u32 %v506, 4294901760
    %508 = vmatpush.msra.mxu0 %v507
    %v509 = vand.u32 %v33, 4294901760
    %v510 = vsub.f32 %v33, %v509
    %v511 = vand.u32 %v510, 4294901760
    %v512 = vsub.f32 %v510, %v511
    %v513 = vand.u32 %v512, 4294901760
    %514 = vmatpush.msra.mxu0 %v513
    %v515 = vand.u32 %v32, 4294901760
    %v516 = vsub.f32 %v32, %v515
    %v517 = vand.u32 %v516, 4294901760
    %v518 = vsub.f32 %v516, %v517
    %v519 = vand.u32 %v518, 4294901760
    %520 = vmatpush.msra.mxu0 %v519
    %v521 = vand.u32 %v31, 4294901760
    %v522 = vsub.f32 %v31, %v521
    %v523 = vand.u32 %v522, 4294901760
    %v524 = vsub.f32 %v522, %v523
    %v525 = vand.u32 %v524, 4294901760
    %526 = vmatpush.msra.mxu0 %v525
    %v527 = vand.u32 %v30, 4294901760
    %v528 = vsub.f32 %v30, %v527
    %v529 = vand.u32 %v528, 4294901760
    %v530 = vsub.f32 %v528, %v529
    %v531 = vand.u32 %v530, 4294901760
    %532 = vmatpush.msra.mxu0 %v531
    %v533 = vand.u32 %v52, 4294901760
    %534 = vmatmul.f32.gmra.mxu0 %v533
    %v535 = vpop.f32.mrf.mxu0
    %v536 = vadd.f32 %v435, %v535
    %537 = vdwg.mxu0
    %v538 = vand.u32 %v45, 4294901760
    %v539 = vsub.f32 %v45, %v538
    %540 = vmatpush.msra.mxu0 %v539
    %v541 = vand.u32 %v44, 4294901760
    %v542 = vsub.f32 %v44, %v541
    %543 = vmatpush.msra.mxu0 %v542
    %v544 = vand.u32 %v43, 4294901760
    %v545 = vsub.f32 %v43, %v544
    %546 = vmatpush.msra.mxu0 %v545
    %v547 = vand.u32 %v42, 4294901760
    %v548 = vsub.f32 %v42, %v547
    %549 = vmatpush.msra.mxu0 %v548
    %v550 = vand.u32 %v41, 4294901760
    %v551 = vsub.f32 %v41, %v550
    %552 = vmatpush.msra.mxu0 %v551
    %v553 = vand.u32 %v40, 4294901760
    %v554 = vsub.f32 %v40, %v553
    %555 = vmatpush.msra.mxu0 %v554
    %v556 = vand.u32 %v39, 4294901760
    %v557 = vsub.f32 %v39, %v556
    %558 = vmatpush.msra.mxu0 %v557
    %v559 = vand.u32 %v38, 4294901760
    %v560 = vsub.f32 %v38, %v559
    %561 = vmatpush.msra.mxu0 %v560
    %v562 = vand.u32 %v37, 4294901760
    %v563 = vsub.f32 %v37, %v562
    %564 = vmatpush.msra.mxu0 %v563
    %v565 = vand.u32 %v36, 4294901760
    %v566 = vsub.f32 %v36, %v565
    %567 = vmatpush.msra.mxu0 %v566
    %v568 = vand.u32 %v35, 4294901760
    %v569 = vsub.f32 %v35, %v568
    %570 = vmatpush.msra.mxu0 %v569
    %v571 = vand.u32 %v34, 4294901760
    %v572 = vsub.f32 %v34, %v571
    %573 = vmatpush.msra.mxu0 %v572
    %v574 = vand.u32 %v33, 4294901760
    %v575 = vsub.f32 %v33, %v574
    %576 = vmatpush.msra.mxu0 %v575
    %v577 = vand.u32 %v32, 4294901760
    %v578 = vsub.f32 %v32, %v577
    %579 = vmatpush.msra.mxu0 %v578
    %v580 = vand.u32 %v31, 4294901760
    %v581 = vsub.f32 %v31, %v580
    %582 = vmatpush.msra.mxu0 %v581
    %v583 = vand.u32 %v30, 4294901760
    %v584 = vsub.f32 %v30, %v583
    %585 = vmatpush.msra.mxu0 %v584
    %v586 = vand.u32 %v52, 4294901760
    %v587 = vsub.f32 %v52, %v586
    %588 = vmatmul.f32.gmra.mxu0 %v587
    %v589 = vpop.f32.mrf.mxu0
    %v590 = vadd.f32 %v536, %v589
    %591 = vdwg.mxu0
    %v592 = vand.u32 %v45, 4294901760
    %593 = vmatpush.msra.mxu0 %v592
    %v594 = vand.u32 %v44, 4294901760
    %595 = vmatpush.msra.mxu0 %v594
    %v596 = vand.u32 %v43, 4294901760
    %597 = vmatpush.msra.mxu0 %v596
    %v598 = vand.u32 %v42, 4294901760
    %599 = vmatpush.msra.mxu0 %v598
    %v600 = vand.u32 %v41, 4294901760
    %601 = vmatpush.msra.mxu0 %v600
    %v602 = vand.u32 %v40, 4294901760
    %603 = vmatpush.msra.mxu0 %v602
    %v604 = vand.u32 %v39, 4294901760
    %605 = vmatpush.msra.mxu0 %v604
    %v606 = vand.u32 %v38, 4294901760
    %607 = vmatpush.msra.mxu0 %v606
    %v608 = vand.u32 %v37, 4294901760
    %609 = vmatpush.msra.mxu0 %v608
    %v610 = vand.u32 %v36, 4294901760
    %611 = vmatpush.msra.mxu0 %v610
    %v612 = vand.u32 %v35, 4294901760
    %613 = vmatpush.msra.mxu0 %v612
    %v614 = vand.u32 %v34, 4294901760
    %615 = vmatpush.msra.mxu0 %v614
    %v616 = vand.u32 %v33, 4294901760
    %617 = vmatpush.msra.mxu0 %v616
    %v618 = vand.u32 %v32, 4294901760
    %619 = vmatpush.msra.mxu0 %v618
    %v620 = vand.u32 %v31, 4294901760
    %621 = vmatpush.msra.mxu0 %v620
    %v622 = vand.u32 %v30, 4294901760
    %623 = vmatpush.msra.mxu0 %v622
    %v624 = vand.u32 %v52, 4294901760
    %v625 = vsub.f32 %v52, %v624
    %v626 = vand.u32 %v625, 4294901760
    %627 = vmatmul.f32.gmra.mxu0 %v626
    %v628 = vpop.f32.mrf.mxu0
    %v629 = vadd.f32 %v590, %v628
    %630 = vdwg.mxu0
    %v631 = vand.u32 %v45, 4294901760
    %v632 = vsub.f32 %v45, %v631
    %v633 = vand.u32 %v632, 4294901760
    %634 = vmatpush.msra.mxu0 %v633
    %v635 = vand.u32 %v44, 4294901760
    %v636 = vsub.f32 %v44, %v635
    %v637 = vand.u32 %v636, 4294901760
    %638 = vmatpush.msra.mxu0 %v637
    %v639 = vand.u32 %v43, 4294901760
    %v640 = vsub.f32 %v43, %v639
    %v641 = vand.u32 %v640, 4294901760
    %642 = vmatpush.msra.mxu0 %v641
    %v643 = vand.u32 %v42, 4294901760
    %v644 = vsub.f32 %v42, %v643
    %v645 = vand.u32 %v644, 4294901760
    %646 = vmatpush.msra.mxu0 %v645
    %v647 = vand.u32 %v41, 4294901760
    %v648 = vsub.f32 %v41, %v647
    %v649 = vand.u32 %v648, 4294901760
    %650 = vmatpush.msra.mxu0 %v649
    %v651 = vand.u32 %v40, 4294901760
    %v652 = vsub.f32 %v40, %v651
    %v653 = vand.u32 %v652, 4294901760
    %654 = vmatpush.msra.mxu0 %v653
    %v655 = vand.u32 %v39, 4294901760
    %v656 = vsub.f32 %v39, %v655
    %v657 = vand.u32 %v656, 4294901760
    %658 = vmatpush.msra.mxu0 %v657
    %v659 = vand.u32 %v38, 4294901760
    %v660 = vsub.f32 %v38, %v659
    %v661 = vand.u32 %v660, 4294901760
    %662 = vmatpush.msra.mxu0 %v661
    %v663 = vand.u32 %v37, 4294901760
    %v664 = vsub.f32 %v37, %v663
    %v665 = vand.u32 %v664, 4294901760
    %666 = vmatpush.msra.mxu0 %v665
    %v667 = vand.u32 %v36, 4294901760
    %v668 = vsub.f32 %v36, %v667
    %v669 = vand.u32 %v668, 4294901760
    %670 = vmatpush.msra.mxu0 %v669
    %v671 = vand.u32 %v35, 4294901760
    %v672 = vsub.f32 %v35, %v671
    %v673 = vand.u32 %v672, 4294901760
    %674 = vmatpush.msra.mxu0 %v673
    %v675 = vand.u32 %v34, 4294901760
    %v676 = vsub.f32 %v34, %v675
    %v677 = vand.u32 %v676, 4294901760
    %678 = vmatpush.msra.mxu0 %v677
    %v679 = vand.u32 %v33, 4294901760
    %v680 = vsub.f32 %v33, %v679
    %v681 = vand.u32 %v680, 4294901760
    %682 = vmatpush.msra.mxu0 %v681
    %v683 = vand.u32 %v32, 4294901760
    %v684 = vsub.f32 %v32, %v683
    %v685 = vand.u32 %v684, 4294901760
    %686 = vmatpush.msra.mxu0 %v685
    %v687 = vand.u32 %v31, 4294901760
    %v688 = vsub.f32 %v31, %v687
    %v689 = vand.u32 %v688, 4294901760
    %690 = vmatpush.msra.mxu0 %v689
    %v691 = vand.u32 %v30, 4294901760
    %v692 = vsub.f32 %v30, %v691
    %v693 = vand.u32 %v692, 4294901760
    %694 = vmatpush.msra.mxu0 %v693
    %v695 = vand.u32 %v52, 4294901760
    %696 = vmatmul.f32.gmra.mxu0 %v695
    %v697 = vpop.f32.mrf.mxu0
    %v698 = vadd.f32 %v629, %v697
    %699 = vdwg.mxu0
    %v700 = vand.u32 %v45, 4294901760
    %701 = vmatpush.msra.mxu0 %v700
    %v702 = vand.u32 %v44, 4294901760
    %703 = vmatpush.msra.mxu0 %v702
    %v704 = vand.u32 %v43, 4294901760
    %705 = vmatpush.msra.mxu0 %v704
    %v706 = vand.u32 %v42, 4294901760
    %707 = vmatpush.msra.mxu0 %v706
    %v708 = vand.u32 %v41, 4294901760
    %709 = vmatpush.msra.mxu0 %v708
    %v710 = vand.u32 %v40, 4294901760
    %711 = vmatpush.msra.mxu0 %v710
    %v712 = vand.u32 %v39, 4294901760
    %713 = vmatpush.msra.mxu0 %v712
    %v714 = vand.u32 %v38, 4294901760
    %715 = vmatpush.msra.mxu0 %v714
    %v716 = vand.u32 %v37, 4294901760
    %717 = vmatpush.msra.mxu0 %v716
    %v718 = vand.u32 %v36, 4294901760
    %719 = vmatpush.msra.mxu0 %v718
    %v720 = vand.u32 %v35, 4294901760
    %721 = vmatpush.msra.mxu0 %v720
    %v722 = vand.u32 %v34, 4294901760
    %723 = vmatpush.msra.mxu0 %v722
    %v724 = vand.u32 %v33, 4294901760
    %725 = vmatpush.msra.mxu0 %v724
    %v726 = vand.u32 %v32, 4294901760
    %727 = vmatpush.msra.mxu0 %v726
    %v728 = vand.u32 %v31, 4294901760
    %729 = vmatpush.msra.mxu0 %v728
    %v730 = vand.u32 %v30, 4294901760
    %731 = vmatpush.msra.mxu0 %v730
    %v732 = vand.u32 %v52, 4294901760
    %733 = vmatmul.f32.gmra.mxu0 %v732
    %v734 = vpop.f32.mrf.mxu0
    %v735 = vadd.f32 %v698, %v734
    %736 = vdwg.mxu0
    %737 = vst [vmem:[#allocation2] sm:$0xff] %v735
    // Predicated region
    $region10: #{_masking_impl.1} parent=1 // pred_check
      _
    $region11: #{_masking_impl.1} parent=1 // pred_check_branch
      %739 = sbr.rel (0) target = $region13
    $region12: #{_masking_impl.1} parent=1 // pred_region
      %741 = vsyncadd [#allocation3], 64
      %s742 = sshll.u32 [#allocation2], 4
      %s743 = int_to_ptr.vmem [resolvable:$true] %s742
      %s744 = sshll.u32 %s2, 4
      %s745 = int_to_ptr.hbm [resolvable:$true] %s744
      %750 = dma.vmem_to_hbm [thread:$0]  %s743, 64, %s745, [#allocation3], 64, 64, 4
    $region13: #{_masking_impl.1} parent=1 // pred_fallthru
      _
    // Predicated region
    $region14: #{_masking_impl.1} parent=1 // pred_check
      _
    $region15: #{_masking_impl.1} parent=1 // pred_check_branch
      %752 = sbr.rel (0) target = $region17
    $region16: #{_masking_impl.1} parent=1 // pred_region
      %754 = dma.done [#allocation3], 128
    $region17: #{_masking_impl.1} parent=1 // pred_fallthru
      _
    %755 = vsyncpa [#allocation3], 1

</llo_original>
